<compile_context>
chip_gen: v6e
topology: v6e:2x2x1
jax: 0.10.0
libtpu: 0.0.40
codegen_flags: <defaults>
</compile_context>

<pallas_src>
import functools

import jax
import jax.numpy as jnp
from jax.experimental import pallas as pl
from jax.experimental.pallas import tpu as pltpu


def _smoothed_target_and_softplus(x, lbl, *, smoothing, num_classes):
    """Label-smoothed one-hot target t and stable softplus(-x)."""
    cols = jax.lax.broadcasted_iota(jnp.int32, x.shape, 1)
    off_value = jnp.float32(smoothing / num_classes)
    on_value = jnp.float32(1.0 - smoothing + smoothing / num_classes)
    t = jnp.where(cols == lbl, on_value, off_value)
    # log(1 + exp(-x)) = max(-x, 0) + log1p(exp(-|x|))
    sp = jnp.maximum(-x, 0.0) + jnp.log1p(jnp.exp(-jnp.abs(x)))
    return t, sp


def _partial_sum_rows(loss, tb, C):
    """(tb, C) -> (8, C) partial: pure vreg adds, no cross-lane reduce."""
    return loss.reshape(tb // 8, 8, C).sum(axis=0)


def _bce_kernel(lbl_ref, x_ref, out_ref, *, smoothing, num_classes, total_rows):
    """Default path: weight=None, pos_weight=None."""
    i = pl.program_id(0)
    tb, C = x_ref.shape

    x = x_ref[...].astype(jnp.float32)            # (tb, C), f32 math on-chip
    lbl = lbl_ref[...]                            # (tb, 1) int32

    t, sp = _smoothed_target_and_softplus(
        x, lbl, smoothing=smoothing, num_classes=num_classes)
    loss = (1.0 - t) * x + sp

    # Mask rows past the true batch size (B may not divide tb).
    rows = jax.lax.broadcasted_iota(jnp.int32, x.shape, 0) + i * tb
    loss = jnp.where(rows < total_rows, loss, 0.0)

    out_ref[...] = _partial_sum_rows(loss, tb, C)


def _bce_kernel_weighted(lbl_ref, x_ref, w_ref, pw_ref, out_ref,
                         *, smoothing, num_classes, total_rows):
    """Generic path with per-class weight / pos_weight."""
    i = pl.program_id(0)
    tb, C = x_ref.shape

    x = x_ref[...].astype(jnp.float32)
    lbl = lbl_ref[...]
    w = w_ref[...]                                # (1, C), broadcast over rows
    pw = pw_ref[...]                              # (1, C)

    t, sp = _smoothed_target_and_softplus(
        x, lbl, smoothing=smoothing, num_classes=num_classes)
    # F.binary_cross_entropy_with_logits:
    #   l = w * [ (1 - t) * x + (1 + (pw - 1) * t) * log(1 + exp(-x)) ]
    loss = w * ((1.0 - t) * x + (1.0 + (pw - 1.0) * t) * sp)

    rows = jax.lax.broadcasted_iota(jnp.int32, x.shape, 0) + i * tb
    loss = jnp.where(rows < total_rows, loss, 0.0)

    out_ref[...] = _partial_sum_rows(loss, tb, C)


def binary_cross_entropy(x, target_idx, *, smoothing=0.1,
                         weight=None, pos_weight=None,
                         tb=None, vmem_limit_bytes=48 * 1024 * 1024):
    """BCE-with-logits + label smoothing from dense int targets, mean reduction."""
    B, C = x.shape
    assert target_idx.shape[0] == B
    lbl = target_idx.astype(jnp.int32).reshape(B, 1)

    # --- Row-tile selection: big enough to hit the HBM roofline, small enough
    # to stay well inside VMEM (double-buffered logits + f32 temporaries).
    itemsize = jnp.dtype(x.dtype).itemsize
    if tb is None:
        budget_bytes = 4 * 1024 * 1024            # per logits block
        tb = budget_bytes // max(1, C * itemsize)
        tb = max(8, min(2048, (tb // 8) * 8))
    b_pad = ((B + 7) // 8) * 8                    # round batch up to sublanes
    tb = int(min(max(8, (tb // 8) * 8), b_pad))
    grid = pl.cdiv(B, tb)

    kw = dict(smoothing=float(smoothing), num_classes=C, total_rows=B)

    if weight is None and pos_weight is None:
        # Specialized default path: no weight blocks, fewer VALU ops.
        kernel = functools.partial(_bce_kernel, **kw)
        in_specs = [
            pl.BlockSpec((tb, 1), lambda i: (i, 0)),   # labels
            pl.BlockSpec((tb, C), lambda i: (i, 0)),   # logits (native dtype)
        ]
        args = (lbl, x)
    else:
        w = jnp.ones((C,), jnp.float32) if weight is None \
            else jnp.asarray(weight, jnp.float32)
        pw = jnp.ones((C,), jnp.float32) if pos_weight is None \
            else jnp.asarray(pos_weight, jnp.float32)
        w = jnp.broadcast_to(w.reshape(-1), (C,)).reshape(1, C)
        pw = jnp.broadcast_to(pw.reshape(-1), (C,)).reshape(1, C)
        kernel = functools.partial(_bce_kernel_weighted, **kw)
        in_specs = [
            pl.BlockSpec((tb, 1), lambda i: (i, 0)),   # labels
            pl.BlockSpec((tb, C), lambda i: (i, 0)),   # logits
            pl.BlockSpec((1, C), lambda i: (0, 0)),    # weight (per-class)
            pl.BlockSpec((1, C), lambda i: (0, 0)),    # pos_weight (per-class)
        ]
        args = (lbl, x, w, pw)

    # Each grid step writes its own (8, C) partial -> grid axis is truly
    # "parallel" (megacore on v7x); tiny final combine happens in XLA below.
    partials = pl.pallas_call(
        kernel,
        out_shape=jax.ShapeDtypeStruct((8 * grid, C), jnp.float32),
        grid_spec=pltpu.PrefetchScalarGridSpec(
            num_scalar_prefetch=0,
            grid=(grid,),
            in_specs=in_specs,
            out_specs=pl.BlockSpec((8, C), lambda i: (i, 0)),
        ),
        compiler_params=pltpu.CompilerParams(
            dimension_semantics=("parallel",),
            vmem_limit_bytes=vmem_limit_bytes),
    )(*args)

    return jnp.sum(partials) / jnp.float32(B * C)


# ----------------------------- references ----------------------------------

def _reference(x, target_idx, smoothing=0.1):
    """Pure-JAX reference mirroring the PyTorch module with default args."""
    B, C = x.shape
    x = x.astype(jnp.float32)
    off = smoothing / C
    on = 1.0 - smoothing + off
    t = jnp.full((B, C), off, jnp.float32).at[jnp.arange(B), target_idx].set(on)
    loss = jnp.maximum(x, 0.0) - x * t + jnp.log1p(jnp.exp(-jnp.abs(x)))
    return loss.mean()


def _reference_weighted(x, target_idx, smoothing, w, pw):
    """Pure-JAX reference with per-class weight / pos_weight."""
    B, C = x.shape
    x = x.astype(jnp.float32)
    off = smoothing / C
    on = 1.0 - smoothing + off
    t = jnp.full((B, C), off, jnp.float32).at[jnp.arange(B), target_idx].set(on)
    sp = jnp.maximum(-x, 0.0) + jnp.log1p(jnp.exp(-jnp.abs(x)))
    loss = w[None, :] * ((1.0 - t) * x + (1.0 + (pw[None, :] - 1.0) * t) * sp)
    return loss.mean()


if __name__ == "__main__":
    key = jax.random.PRNGKey(0)
    kx, kt, kw, kp = jax.random.split(key, 4)

    B, C = 16, 128
    x = jax.random.normal(kx, (B, C), dtype=jnp.float32)
    target = jax.random.randint(kt, (B,), 0, C, dtype=jnp.int32)

    # 1) default path (weight=None, pos_weight=None), f32 logits.
    loss = jax.block_until_ready(binary_cross_entropy(x, target, smoothing=0.1))
    ref = _reference(x, target, smoothing=0.1)
    assert jnp.allclose(loss, ref, atol=1e-5, rtol=1e-5), (loss, ref)

    # 2) ragged batch (B not divisible by tb) + bf16 storage dtype.
    B2 = 20
    x2 = jax.random.normal(kx, (B2, C), dtype=jnp.float32).astype(jnp.bfloat16)
    t2 = jax.random.randint(kt, (B2,), 0, C, dtype=jnp.int32)
    loss2 = jax.block_until_ready(
        binary_cross_entropy(x2, t2, smoothing=0.1, tb=16))
    ref2 = _reference(x2, t2, smoothing=0.1)
    assert jnp.allclose(loss2, ref2, atol=1e-4, rtol=1e-4), (loss2, ref2)

    # 3) per-class weight / pos_weight path.
    w = jax.random.uniform(kw, (C,), jnp.float32, minval=0.5, maxval=1.5)
    pw = jax.random.uniform(kp, (C,), jnp.float32, minval=0.5, maxval=2.0)
    loss3 = jax.block_until_ready(
        binary_cross_entropy(x, target, smoothing=0.1, weight=w, pos_weight=pw))
    ref3 = _reference_weighted(x, target, 0.1, w, pw)
    assert jnp.allclose(loss3, ref3, atol=1e-5, rtol=1e-5), (loss3, ref3)

    print("KERNEL_OK")
</pallas_src>

<mosaic_0001>
module attributes {stable_mosaic.version = 11 : i64} {
  func.func @_bce_kernel(%arg0: i32, %arg1: memref<16x1xi32, #tpu.memory_space<vmem>>, %arg2: memref<16x128xf32, #tpu.memory_space<vmem>>, %arg3: memref<8x128xf32, #tpu.memory_space<vmem>>) attributes {dimension_semantics = [#tpu.dimension_semantics<parallel>], iteration_bounds = array<i64: 1>, scalar_prefetch = 0 : i64, scratch_operands = 0 : i64, tpu.core_type = #tpu.core_type<tc>, window_params = [{transform_indices = @transform_0, window_bounds = array<i64: 16, 1>}, {transform_indices = @transform_1, window_bounds = array<i64: 16, 128>}, {transform_indices = @transform_2, window_bounds = array<i64: 8, 128>}]} {
    %c0 = arith.constant 0 : index
    %c0_0 = arith.constant 0 : index
    %0 = vector.load %arg2[%c0, %c0_0] : memref<16x128xf32, #tpu.memory_space<vmem>>, vector<16x128xf32>
    %c0_1 = arith.constant 0 : index
    %c0_2 = arith.constant 0 : index
    %1 = vector.load %arg1[%c0_1, %c0_2] : memref<16x1xi32, #tpu.memory_space<vmem>>, vector<16x1xi32>
    %2 = tpu.iota {dimensions = array<i32: 1>} : vector<16x128xi32>
    %3 = vector.broadcast %1 : vector<16x1xi32> to vector<16x128xi32>
    %4 = arith.cmpi eq, %2, %3 : vector<16x128xi32>
    %cst = arith.constant 0.900781273 : f32
    %cst_3 = arith.constant 7.812500e-04 : f32
    %5 = vector.broadcast %cst : f32 to vector<16x128xf32>
    %6 = vector.broadcast %cst_3 : f32 to vector<16x128xf32>
    %7 = arith.select %4, %5, %6 : vector<16x128xi1>, vector<16x128xf32>
    %cst_4 = arith.constant 0.000000e+00 : f32
    %8 = vector.broadcast %cst_4 : f32 to vector<16x128xf32>
    %9 = arith.subf %8, %0 : vector<16x128xf32>
    %cst_5 = arith.constant 0.000000e+00 : f32
    %10 = vector.broadcast %cst_5 : f32 to vector<16x128xf32>
    %11 = arith.maximumf %9, %10 : vector<16x128xf32>
    %12 = math.absf %0 : vector<16x128xf32>
    %cst_6 = arith.constant 0.000000e+00 : f32
    %13 = vector.broadcast %cst_6 : f32 to vector<16x128xf32>
    %14 = arith.subf %13, %12 : vector<16x128xf32>
    %15 = math.exp %14 : vector<16x128xf32>
    %16 = math.log1p %15 : vector<16x128xf32>
    %17 = arith.addf %11, %16 : vector<16x128xf32>
    %cst_7 = arith.constant 1.000000e+00 : f32
    %18 = vector.broadcast %cst_7 : f32 to vector<16x128xf32>
    %19 = arith.subf %18, %7 : vector<16x128xf32>
    %20 = arith.mulf %19, %0 : vector<16x128xf32>
    %21 = arith.addf %20, %17 : vector<16x128xf32>
    %22 = tpu.iota {dimensions = array<i32: 0>} : vector<16x128xi32>
    %c16_i32 = arith.constant 16 : i32
    %23 = arith.muli %arg0, %c16_i32 : i32
    %24 = vector.broadcast %23 : i32 to vector<16x128xi32>
    %25 = arith.addi %22, %24 : vector<16x128xi32>
    %c16_i32_8 = arith.constant 16 : i32
    %26 = vector.broadcast %c16_i32_8 : i32 to vector<16x128xi32>
    %27 = arith.cmpi slt, %25, %26 : vector<16x128xi32>
    %cst_9 = arith.constant 0.000000e+00 : f32
    %28 = vector.broadcast %cst_9 : f32 to vector<16x128xf32>
    %29 = arith.select %27, %21, %28 : vector<16x128xi1>, vector<16x128xf32>
    %30 = vector.shape_cast %29 : vector<16x128xf32> to vector<2x8x128xf32>
    %cst_10 = arith.constant dense<0.000000e+00> : vector<8x128xf32>
    %31 = vector.multi_reduction <add>, %30, %cst_10 [0] : vector<2x8x128xf32> to vector<8x128xf32>
    %c0_11 = arith.constant 0 : index
    %c0_12 = arith.constant 0 : index
    %32 = vector.load %arg3[%c0_11, %c0_12] : memref<8x128xf32, #tpu.memory_space<vmem>>, vector<8x128xf32>
    tpu.vector_store %arg3[%c0_11, %c0_12], %31 {strides = array<i32>} : memref<8x128xf32, #tpu.memory_space<vmem>>, vector<8x128xf32>,
    return
  }
  func.func @transform_0(%arg0: i32) -> (i32, i32) {
    %c0_i32 = arith.constant 0 : i32
    %c0_i32_0 = arith.constant 0 : i32
    return %arg0, %c0_i32 : i32, i32
  }
  func.func @transform_1(%arg0: i32) -> (i32, i32) {
    %c0_i32 = arith.constant 0 : i32
    %c0_i32_0 = arith.constant 0 : i32
    return %arg0, %c0_i32 : i32, i32
  }
  func.func @transform_2(%arg0: i32) -> (i32, i32) {
    %c0_i32 = arith.constant 0 : i32
    %c0_i32_0 = arith.constant 0 : i32
    return %arg0, %c0_i32 : i32, i32
  }
}

</mosaic_0001>

<llo_original>
// kernel: tpu_custom_call.1
$region0: #{tpu_custom_call.1}
  #allocation0 [shape = 'u32[]', space=smem, size = 0x4, offset = 0x4, fixed_abs, tag = 'smem constant byte address 0x4 - core index']
  #allocation1 [shape = 'u32[144,128]{1,0:T(1,128)}', space=vmem, size = 0x12000, scoped, tag = 'internal scratch']
  %s0 = inlined_call_operand.vmem [shape: s32[16,1], index: 0, kind: input, shape index: {}]
  %s1 = inlined_call_operand.vmem [shape: f32[16,128], index: 1, kind: input, shape index: {}]
  %s2 = inlined_call_operand.hbm [shape: f32[8,128], index: 2, kind: output, shape index: {}]
  %s3 = sld [smem:[#allocation0]]
  $region18: #{tpu_custom_call.1} parent=0
    _
  %s5 = ssub.s32 1, %s3
  %s6 = scalar_select 0, %s5, %s3
  $region1: #{tpu_custom_call.1} parent=0
    #allocation2 [shape = 'u8[4096]{0}', space=vmem, size = 0x1000, scoped, tag = 'output window, operand 0, single buffered']
    #allocation3 [shape = 's32[1]{0}', space=sflag, size = 0x4, scoped, tag = 'scoped memory for tpu_custom_call.1']
    %7 = vsyncpa [#allocation3], 0
    // Predicated region
    $region2: #{tpu_custom_call.1} parent=1 // pred_check
      _
    $region3: #{tpu_custom_call.1} parent=1 // pred_check_branch
      %9 = sbr.rel (0) target = $region5
    $region4: #{tpu_custom_call.1} parent=1 // pred_region
      _
    $region5: #{tpu_custom_call.1} parent=1 // pred_fallthru
      _
    // Predicated region
    $region6: #{tpu_custom_call.1} parent=1 // pred_check
      _
    $region7: #{tpu_custom_call.1} parent=1 // pred_check_branch
      %11 = sbr.rel (0) target = $region9
    $region8: #{tpu_custom_call.1} parent=1 // pred_region
      _
    $region9: #{tpu_custom_call.1} parent=1 // pred_fallthru
      _
    %v12 = vld [vmem:[%s1] sm:$0xff]
    %v13 = vld [vmem:[%s1 + $0x8] sm:$0xff]
    %v14 = vld [vmem:[%s0] sm:$0xff]
    %v15 = vld [vmem:[%s0 + $0x8] sm:$0xff]
    %v16 = vlaneseq
    %v17 = vand.u32 %v16, 127
    %18 = vset.pattern.permute.xlu0 0
    %19 = vperm.xlu0 %18, %v14
    %v20 = vpop.permute.xlu0 %19
    %21 = vset.pattern.permute.xlu0 0
    %22 = vperm.xlu0 %21, %v15
    %v23 = vpop.permute.xlu0 %22
    %vm24 = vcmp.eq.s32.totalorder %v17, %v20
    %vm25 = vcmp.eq.s32.totalorder %v17, %v23
    %v26 = vsel %vm24, 0.9007813, 0.00078125
    %v27 = vsel %vm25, 0.9007813, 0.00078125
    %v28 = vsub.f32 0.0, %v12
    %v29 = vsub.f32 0.0, %v13
    %v30 = vmax.f32 %v28, 0.0
    %v31 = vmax.f32 %v29, 0.0
    %v32 = vand.u32 2147483647, %v12
    %v33 = vand.u32 2147483647, %v13
    %v34 = vsub.f32 0.0, %v32
    %v35 = vsub.f32 0.0, %v33
    %v36 = vmul.f32 %v34, 1.442695
    %v37 = vpow.pop %v36
    %v38 = vmul.f32 %v35, 1.442695
    %v39 = vpow.pop %v38
    %v40 = vadd.f32 %v37, 1.0
    %v41 = vlog2.pop %v40
    %v42 = vmul.f32 %v41, 0.6931472
    %v43 = vmul.f32 -0.5, %v37
    %v44 = vadd.f32 %v43, 1.0
    %v45 = vmul.f32 %v44, %v37
    %v46 = vand.u32 2147483647, %v37
    %vm47 = vcmp.lt.f32.partialorder %v46, 0.0004427343
    %v48 = vsel %vm47, %v45, %v42
    %v49 = vadd.f32 %v39, 1.0
    %v50 = vlog2.pop %v49
    %v51 = vmul.f32 %v50, 0.6931472
    %v52 = vmul.f32 -0.5, %v39
    %v53 = vadd.f32 %v52, 1.0
    %v54 = vmul.f32 %v53, %v39
    %v55 = vand.u32 2147483647, %v39
    %vm56 = vcmp.lt.f32.partialorder %v55, 0.0004427343
    %v57 = vsel %vm56, %v54, %v51
    %v58 = vadd.f32 %v30, %v48
    %v59 = vadd.f32 %v31, %v57
    %v60 = vsub.f32 1.0, %v26
    %v61 = vsub.f32 1.0, %v27
    %v62 = vmul.f32 %v60, %v12
    %v63 = vmul.f32 %v61, %v13
    %v64 = vadd.f32 %v62, %v58
    %v65 = vadd.f32 %v63, %v59
    %v66 = vlaneseq
    %v67 = vshrl.u32 %v66, 7
    %v68 = vadd.s32 %v67, 8
    %s69 = smul.u32 0, 16
    %v70 = vstv %s69
    %v71 = vadd.s32 %v67, %v70
    %v72 = vadd.s32 %v68, %v70
    %vm73 = vcmp.lt.s32.totalorder %v71, 16
    %vm74 = vcmp.lt.s32.totalorder %v72, 16
    %v75 = vsel %vm73, %v64, 0.0
    %v76 = vsel %vm74, %v65, 0.0
    %v77 = vadd.f32 %v75, %v76
    %78 = vst [vmem:[#allocation2] sm:$0xff] %v77
    // Predicated region
    $region10: #{tpu_custom_call.1} parent=1 // pred_check
      _
    $region11: #{tpu_custom_call.1} parent=1 // pred_check_branch
      %80 = sbr.rel (0) target = $region13
    $region12: #{tpu_custom_call.1} parent=1 // pred_region
      %s82 = ssub.s32 128, 128
      %83 = vsyncadd [#allocation3], %s82
      %s85 = sshll.u32 [#allocation2], 4
      %s86 = int_to_ptr.vmem [resolvable:$true] %s85
      %88 = dma.vmem_to_hbm [thread:$0]  %s86, 128, %s2, [#allocation3]
    $region13: #{tpu_custom_call.1} parent=1 // pred_fallthru
      _
    // Predicated region
    $region14: #{tpu_custom_call.1} parent=1 // pred_check
      _
    $region15: #{tpu_custom_call.1} parent=1 // pred_check_branch
      %90 = sbr.rel (0) target = $region17
    $region16: #{tpu_custom_call.1} parent=1 // pred_region
      %91 = dma.done [#allocation3], 128
    $region17: #{tpu_custom_call.1} parent=1 // pred_fallthru
      _
    %92 = vsyncpa [#allocation3], 1

</llo_original>
